<compile_context>
chip_gen: v6e
topology: v6e:2x2x1
jax: 0.10.0
libtpu: 0.0.40
codegen_flags: <defaults>
</compile_context>

<pallas_src>
import functools
import math

import jax
import jax.numpy as jnp
from jax.experimental import pallas as pl
from jax.experimental.pallas import tpu as pltpu


def _parallel_branch_kernel(x_ref, w_ref, b_ref, o_ref):
    """One batch tile: out = SiLU(x @ W_total + b_total) — one MXU pass + epilogue."""
    pre = jnp.dot(x_ref[...], w_ref[...],
                  preferred_element_type=jnp.float32) + b_ref[...]
    # SiLU.  jax.nn.sigmoid lowers to the EUP logistic; the approx-reciprocal
    # rewrite (pl.reciprocal(..., approx=True)) is deliberately NOT used because
    # it would break the 1e-5 f32 tolerance against the reference.
    o_ref[...] = (pre * jax.nn.sigmoid(pre)).astype(o_ref.dtype)


def pack_parallel_branch_params(params, num_heads=2, compute_dtype=jnp.float32):
    """Fold scattered_layer -> value projection -> (+shortcut) into one matmul.

    Exact because seq_length == 1 makes every attention probability 1.0
    (attention(h) == value(h)) and the two Linears compose without a
    nonlinearity in between.  `num_heads` has no effect on the output for
    seq_length == 1 and is accepted only for API parity.
    Call this ONCE per model; reuse the result across forward calls.
    """
    del num_heads
    f32 = jnp.float32
    w_lin = jnp.asarray(params["w_lin"], f32)          # (H, d_in) torch layout
    b_lin = jnp.asarray(params["b_lin"], f32)          # (H,)
    w_v = jnp.asarray(params["w_v"], f32)              # (H, H)
    b_v = jnp.asarray(params["b_v"], f32)              # (H,)
    H, d_in = w_lin.shape
    hp = pl.cdiv(H, 128) * 128                         # lane-pad hidden to 128-multiple
    has_shortcut = params.get("w_sc", None) is not None

    # Fold in f32; cast once at the end.
    w_fold = w_lin.T @ w_v.T                           # (d_in, H)
    b_fold = b_lin @ w_v.T + b_v                       # (H,)

    if has_shortcut:
        dk = d_in
        w_total = w_fold + jnp.asarray(params["w_sc"], f32).T
        b_total = b_fold + jnp.asarray(params["b_sc"], f32)
        w_pad = jnp.zeros((dk, hp), f32).at[:, :H].set(w_total)
    else:
        # input_size == hidden_size: the shortcut is identity -> add I.
        # Padded diagonal entries only ever multiply zero-padded x columns, so
        # padded output columns stay exactly SiLU(0) = 0 and are sliced off.
        dk = hp
        w_pad = (jnp.zeros((hp, hp), f32).at[:d_in, :H].set(w_fold)
                 + jnp.eye(hp, dtype=f32))
        b_total = b_fold
    b_pad = jnp.zeros((1, hp), f32).at[0, :H].set(b_total)

    return dict(
        w_total=w_pad.astype(compute_dtype),
        b_total=b_pad,                                 # bias stays f32 (post-accumulate add)
        hidden=H, dk=dk, hp=hp, has_shortcut=has_shortcut,
        compute_dtype=jnp.dtype(compute_dtype),
    )


def parallel_branch_apply(x, packed, *, block_batch=512):
    """Run the fused kernel.  `packed` comes from pack_parallel_branch_params()."""
    f32 = jnp.float32
    H, dk, hp = packed["hidden"], packed["dk"], packed["hp"]
    cdt = packed["compute_dtype"]
    itm = jnp.dtype(cdt).itemsize
    B, d_in = x.shape

    # Batch tile: multiple of the sublane pack (8 for 32-bit, 16 for bf16) and
    # sized for >= 2 grid steps when possible so v7x's two TensorCores both get
    # work via the "parallel" batch axis.
    min_rows = 16 if itm == 2 else 8
    tb = pl.cdiv(pl.cdiv(B, 2), min_rows) * min_rows
    tb = max(min_rows, min(block_batch, tb))

    # Per-generation VMEM budget (v5e/v6e: 128 MiB, v7x: 64 MiB per TC).
    try:
        phys_vmem = int(getattr(pltpu.get_tpu_info(), "vmem_capacity_bytes", 64 << 20))
    except Exception:  # interpret mode / info unavailable -> assume v7x floor
        phys_vmem = 64 << 20
    vmem_cap = int(0.8 * phys_vmem)      # headroom for compiler internal scratch

    # Constant-index weight/bias blocks are still double-buffered by the default
    # pipeliner; after the fold that is a single (dk, hp) matrix so we simply
    # budget for both buffers (pipeline_mode=pl.Buffered(1) could reclaim one).
    weight_bytes = 2 * (dk * hp * itm + hp * 4)

    def step_bytes(t):
        return (2 * t * dk * itm         # x tile, double-buffered
                + 2 * t * hp * 4         # out tile (f32), double-buffered
                + t * hp * 4)            # pre-activation intermediate

    while tb > min_rows and weight_bytes + step_bytes(tb) > vmem_cap:
        tb = max(min_rows, (tb // 2 // min_rows) * min_rows)
    # TODO(synk): if the folded (dk, hp) weight alone ever exceeds vmem_cap (very
    # large hidden on v7x), add an hp grid axis with an output accumulator
    # instead of shrinking the batch tile.
    vmem_limit = int(min(vmem_cap, max(32 << 20, 2 * (weight_bytes + step_bytes(tb)))))

    b_pad = pl.cdiv(B, tb) * tb
    if b_pad == B and dk == d_in:
        x_in = x.astype(cdt)
    else:  # zero-pad rows (sliced off) and, in the identity case, lane-pad columns
        x_in = jnp.zeros((b_pad, dk), cdt).at[:B, :d_in].set(x.astype(cdt))

    out_padded = pl.pallas_call(
        _parallel_branch_kernel,
        out_shape=jax.ShapeDtypeStruct((b_pad, hp), f32),
        grid_spec=pltpu.PrefetchScalarGridSpec(
            num_scalar_prefetch=0,
            grid=(b_pad // tb,),
            in_specs=[
                pl.BlockSpec((tb, dk), lambda i: (i, 0)),   # x batch tile
                pl.BlockSpec((dk, hp), lambda i: (0, 0)),   # folded W_total (VMEM-resident)
                pl.BlockSpec((1, hp), lambda i: (0, 0)),    # folded b_total (f32)
            ],
            out_specs=pl.BlockSpec((tb, hp), lambda i: (i, 0)),
        ),
        compiler_params=pltpu.CompilerParams(
            dimension_semantics=("parallel",),              # batch splits across TCs on v7x
            vmem_limit_bytes=vmem_limit,
        ),
    )(x_in, packed["w_total"], packed["b_total"])
    return out_padded[:B, :H]


def parallel_branch(x, params, num_heads=2, block_batch=512,
                    compute_dtype=jnp.float32):
    """Convenience wrapper: pack + apply.  For repeated calls pack once and reuse."""
    packed = pack_parallel_branch_params(params, num_heads=num_heads,
                                         compute_dtype=compute_dtype)
    return parallel_branch_apply(x, packed, block_batch=block_batch)


def parallel_branch_ref(x, params, num_heads=2):
    """Pure-JAX reference mirroring the PyTorch forward exactly (incl. q/k/softmax)."""
    if params["w_sc"] is None:
        identity = x
    else:
        identity = x @ params["w_sc"].T + params["b_sc"]
    h = x @ params["w_lin"].T + params["b_lin"]

    xe = h[:, None, :]                                   # (B, 1, H)
    B, S, C = xe.shape
    hd = C // num_heads

    def proj(w, b):
        return (xe @ w.T + b).reshape(B, S, num_heads, hd).transpose(0, 2, 1, 3)

    q = proj(params["w_q"], params["b_q"])
    k = proj(params["w_k"], params["b_k"])
    v = proj(params["w_v"], params["b_v"])
    scores = (q @ k.transpose(0, 1, 3, 2)) / math.sqrt(hd)
    probs = jax.nn.softmax(scores, axis=-1)
    out = (probs @ v).transpose(0, 2, 1, 3).reshape(B, S, C)[:, 0, :]
    return jax.nn.silu(out + identity)


if __name__ == "__main__":
    def linear_init(kw, kb, fan_in, fan_out):
        bound = 1.0 / math.sqrt(fan_in)
        w = jax.random.uniform(kw, (fan_out, fan_in), jnp.float32, -bound, bound)
        b = jax.random.uniform(kb, (fan_out,), jnp.float32, -bound, bound)
        return w, b

    B, D_IN, HIDDEN, NUM_HEADS = 2, 16, 32, 2

    # Case 1: input_size != hidden_size  -> shortcut Linear present.
    keys = jax.random.split(jax.random.PRNGKey(0), 11)
    w_sc, b_sc = linear_init(keys[0], keys[1], D_IN, HIDDEN)
    w_lin, b_lin = linear_init(keys[2], keys[3], D_IN, HIDDEN)
    w_q, b_q = linear_init(keys[4], keys[5], HIDDEN, HIDDEN)
    w_k, b_k = linear_init(keys[6], keys[7], HIDDEN, HIDDEN)
    w_v, b_v = linear_init(keys[8], keys[9], HIDDEN, HIDDEN)
    params = dict(w_sc=w_sc, b_sc=b_sc, w_lin=w_lin, b_lin=b_lin,
                  w_q=w_q, b_q=b_q, w_k=w_k, b_k=b_k, w_v=w_v, b_v=b_v)
    x = jax.random.normal(keys[10], (B, D_IN), jnp.float32)

    # Pack once (hoisted), apply.
    packed1 = pack_parallel_branch_params(params, num_heads=NUM_HEADS)
    out = jax.block_until_ready(parallel_branch_apply(x, packed1))
    ref = parallel_branch_ref(x, params, num_heads=NUM_HEADS)
    assert out.shape == (B, HIDDEN)
    assert jnp.allclose(out, ref, atol=1e-5, rtol=1e-5), "mismatch (shortcut case, f32)"

    # Case 2: input_size == hidden_size -> shortcut is identity (no Linear).
    keys2 = jax.random.split(jax.random.PRNGKey(1), 9)
    w_lin2, b_lin2 = linear_init(keys2[0], keys2[1], HIDDEN, HIDDEN)
    w_q2, b_q2 = linear_init(keys2[2], keys2[3], HIDDEN, HIDDEN)
    w_k2, b_k2 = linear_init(keys2[4], keys2[5], HIDDEN, HIDDEN)
    w_v2, b_v2 = linear_init(keys2[6], keys2[7], HIDDEN, HIDDEN)
    params2 = dict(w_sc=None, b_sc=None, w_lin=w_lin2, b_lin=b_lin2,
                   w_q=w_q2, b_q=b_q2, w_k=w_k2, b_k=b_k2, w_v=w_v2, b_v=b_v2)
    x2 = jax.random.normal(keys2[8], (B, HIDDEN), jnp.float32)

    out2 = jax.block_until_ready(parallel_branch(x2, params2, num_heads=NUM_HEADS))
    ref2 = parallel_branch_ref(x2, params2, num_heads=NUM_HEADS)
    assert out2.shape == (B, HIDDEN)
    assert jnp.allclose(out2, ref2, atol=1e-5, rtol=1e-5), "mismatch (identity case, f32)"

    # Case 3: bf16-in / f32-accumulate path (halves HBM/VMEM traffic); looser tolerance.
    packed_bf16 = pack_parallel_branch_params(params, num_heads=NUM_HEADS,
                                              compute_dtype=jnp.bfloat16)
    out3 = jax.block_until_ready(parallel_branch_apply(x, packed_bf16))
    assert out3.shape == (B, HIDDEN)
    assert jnp.allclose(out3, ref, atol=5e-2, rtol=5e-2), "mismatch (shortcut case, bf16)"

    print("KERNEL_OK")
</pallas_src>

<mosaic_0001>
module attributes {stable_mosaic.version = 11 : i64} {
  func.func @_parallel_branch_kernel(%arg0: i32, %arg1: memref<8x16xf32, #tpu.memory_space<vmem>>, %arg2: memref<16x128xf32, #tpu.memory_space<vmem>>, %arg3: memref<1x128xf32, #tpu.memory_space<vmem>>, %arg4: memref<8x128xf32, #tpu.memory_space<vmem>>) attributes {dimension_semantics = [#tpu.dimension_semantics<parallel>], iteration_bounds = array<i64: 1>, scalar_prefetch = 0 : i64, scratch_operands = 0 : i64, tpu.core_type = #tpu.core_type<tc>, window_params = [{transform_indices = @transform_0, window_bounds = array<i64: 8, 16>}, {pipeline_mode = #tpu.pipeline_mode<synchronous>, transform_indices = @transform_1, window_bounds = array<i64: 16, 128>}, {pipeline_mode = #tpu.pipeline_mode<synchronous>, transform_indices = @transform_2, window_bounds = array<i64: 1, 128>}, {transform_indices = @transform_3, window_bounds = array<i64: 8, 128>}]} {
    %c0 = arith.constant 0 : index
    %c0_0 = arith.constant 0 : index
    %0 = vector.load %arg1[%c0, %c0_0] : memref<8x16xf32, #tpu.memory_space<vmem>>, vector<8x16xf32>
    %c0_1 = arith.constant 0 : index
    %c0_2 = arith.constant 0 : index
    %1 = vector.load %arg2[%c0_1, %c0_2] : memref<16x128xf32, #tpu.memory_space<vmem>>, vector<16x128xf32>
    %cst = arith.constant dense<0.000000e+00> : vector<8x128xf32>
    %2 = tpu.matmul %0, %1, %cst {dimension_numbers = #tpu.dot_dimension_numbers<[1], [0], [0], [1], [0, 0, 1, 1], [], []>} : vector<8x16xf32>, vector<16x128xf32>, vector<8x128xf32> -> vector<8x128xf32>
    %c0_3 = arith.constant 0 : index
    %c0_4 = arith.constant 0 : index
    %3 = vector.load %arg3[%c0_3, %c0_4] : memref<1x128xf32, #tpu.memory_space<vmem>>, vector<1x128xf32>
    %4 = vector.broadcast %3 : vector<1x128xf32> to vector<8x128xf32>
    %5 = arith.addf %2, %4 : vector<8x128xf32>
    %6 = arith.negf %5 : vector<8x128xf32>
    %7 = math.exp %6 : vector<8x128xf32>
    %cst_5 = arith.constant 1.000000e+00 : f32
    %8 = vector.broadcast %cst_5 : f32 to vector<8x128xf32>
    %9 = arith.addf %8, %7 : vector<8x128xf32>
    %10 = arith.divf %8, %9 : vector<8x128xf32>
    %11 = arith.mulf %5, %10 : vector<8x128xf32>
    %c0_6 = arith.constant 0 : index
    %c0_7 = arith.constant 0 : index
    %12 = vector.load %arg4[%c0_6, %c0_7] : memref<8x128xf32, #tpu.memory_space<vmem>>, vector<8x128xf32>
    tpu.vector_store %arg4[%c0_6, %c0_7], %11 {strides = array<i32>} : memref<8x128xf32, #tpu.memory_space<vmem>>, vector<8x128xf32>,
    return
  }
  func.func @transform_0(%arg0: i32) -> (i32, i32) {
    %c0_i32 = arith.constant 0 : i32
    %c0_i32_0 = arith.constant 0 : i32
    return %arg0, %c0_i32 : i32, i32
  }
  func.func @transform_1(%arg0: i32) -> (i32, i32) {
    %c0_i32 = arith.constant 0 : i32
    %c0_i32_0 = arith.constant 0 : i32
    %c0_i32_1 = arith.constant 0 : i32
    return %c0_i32, %c0_i32_0 : i32, i32
  }
  func.func @transform_2(%arg0: i32) -> (i32, i32) {
    %c0_i32 = arith.constant 0 : i32
    %c0_i32_0 = arith.constant 0 : i32
    %c0_i32_1 = arith.constant 0 : i32
    return %c0_i32, %c0_i32_0 : i32, i32
  }
  func.func @transform_3(%arg0: i32) -> (i32, i32) {
    %c0_i32 = arith.constant 0 : i32
    %c0_i32_0 = arith.constant 0 : i32
    return %arg0, %c0_i32 : i32, i32
  }
}

</mosaic_0001>

<llo_original>
// kernel: tpu_custom_call.1
$region0: #{tpu_custom_call.1}
  #allocation0 [shape = 'u32[]', space=smem, size = 0x4, offset = 0x4, fixed_abs, tag = 'smem constant byte address 0x4 - core index']
  #allocation1 [shape = 'u32[144,128]{1,0:T(1,128)}', space=vmem, size = 0x12000, scoped, tag = 'internal scratch']
  %s0 = inlined_call_operand.hbm [shape: f32[8,16], index: 0, kind: input, shape index: {}]
  %s1 = inlined_call_operand.hbm [shape: f32[16,128], index: 1, kind: input, shape index: {}]
  %s2 = inlined_call_operand.vmem [shape: f32[1,128], index: 2, kind: input, shape index: {}]
  %s3 = inlined_call_operand.hbm [shape: f32[8,128], index: 3, kind: output, shape index: {}]
  %s4 = sld [smem:[#allocation0]]
  $region30: #{tpu_custom_call.1} parent=0
    _
  %s6 = ssub.s32 1, %s4
  %s7 = scalar_select 0, %s6, %s4
  $region1: #{tpu_custom_call.1} parent=0
    #allocation2 [shape = 'u8[4096]{0}', space=vmem, size = 0x1000, scoped, tag = 'input window, operand 0, single buffered']
    #allocation3 [shape = 's32[1]{0}', space=sflag, size = 0x4, scoped, tag = 'scoped memory for tpu_custom_call.1']
    #allocation4 [shape = 's32[1]{0}', space=sflag, size = 0x4, scoped, tag = 'scoped memory for tpu_custom_call.1']
    #allocation5 [shape = 'u8[8192]{0}', space=vmem, size = 0x2000, scoped, tag = 'input window, operand 1, single buffered']
    #allocation6 [shape = 's32[1]{0}', space=sflag, size = 0x4, scoped, tag = 'scoped memory for tpu_custom_call.1']
    #allocation7 [shape = 'u8[4096]{0}', space=vmem, size = 0x1000, scoped, tag = 'output window, operand 0, single buffered']
    %8 = vsyncpa [#allocation3], 0
    %9 = vsyncpa [#allocation6], 0
    %10 = vsyncpa [#allocation4], 0
    // Predicated region
    $region2: #{tpu_custom_call.1} parent=1 // pred_check
      _
    $region3: #{tpu_custom_call.1} parent=1 // pred_check_branch
      %12 = sbr.rel (0) target = $region5
    $region4: #{tpu_custom_call.1} parent=1 // pred_region
      %s14 = ssub.s32 128, 128
      %15 = vsyncadd [#allocation3], %s14
      %s17 = sshll.u32 [#allocation2], 4
      %s18 = int_to_ptr.vmem [resolvable:$true] %s17
      %20 = dma.hbm_to_vmem [thread:$0]  %s0, 128, %s18, [#allocation3]
    $region5: #{tpu_custom_call.1} parent=1 // pred_fallthru
      _
    // Predicated region
    $region6: #{tpu_custom_call.1} parent=1 // pred_check
      _
    $region7: #{tpu_custom_call.1} parent=1 // pred_check_branch
      %22 = sbr.rel (0) target = $region9
    $region8: #{tpu_custom_call.1} parent=1 // pred_region
      %s24 = ssub.s32 256, 256
      %25 = vsyncadd [#allocation6], %s24
      %s26 = sshll.u32 [#allocation5], 4
      %s27 = int_to_ptr.vmem [resolvable:$true] %s26
      %32 = dma.hbm_to_vmem [thread:$0]  %s1, 256, %s27, [#allocation6], 128, 128, 8
    $region9: #{tpu_custom_call.1} parent=1 // pred_fallthru
      _
    // Predicated region
    $region10: #{tpu_custom_call.1} parent=1 // pred_check
      _
    $region11: #{tpu_custom_call.1} parent=1 // pred_check_branch
      %34 = sbr.rel (0) target = $region13
    $region12: #{tpu_custom_call.1} parent=1 // pred_region
      _
    $region13: #{tpu_custom_call.1} parent=1 // pred_fallthru
      _
    // Predicated region
    $region14: #{tpu_custom_call.1} parent=1 // pred_check
      _
    $region15: #{tpu_custom_call.1} parent=1 // pred_check_branch
      %36 = sbr.rel (0) target = $region17
    $region16: #{tpu_custom_call.1} parent=1 // pred_region
      %37 = dma.done [#allocation3], 128
    $region17: #{tpu_custom_call.1} parent=1 // pred_fallthru
      _
    // Predicated region
    $region18: #{tpu_custom_call.1} parent=1 // pred_check
      _
    $region19: #{tpu_custom_call.1} parent=1 // pred_check_branch
      %39 = sbr.rel (0) target = $region21
    $region20: #{tpu_custom_call.1} parent=1 // pred_region
      %40 = dma.done [#allocation6], 256
    $region21: #{tpu_custom_call.1} parent=1 // pred_fallthru
      _
    %v41 = vld [vmem:[#allocation2] sm:$0xff]
    %v42 = vld [vmem:[#allocation5] sm:$0xff]
    %v43 = vld [vmem:[#allocation5 + $0x8] sm:$0xff]
    %v44 = vld [vmem:[%s2] sm:$0x1]
    %v46 = vlaneseq
    %v47 = vshrl.u32 %v46, 7
    %v48 = vsub.s32 0, %v47
    %v49 = vrot.slane %v44, %v48
    %vm51 = vcmask 130048
    %v53 = vsel %vm51, %v41, 0
    %55 = vmatprep.subr.mxu0 0.0
    %56 = vmatpush1.msra.mxu0 0.0
    %57 = vmatprep.subr.mxu0 0.0
    %58 = vmatpush1.msra.mxu0 0.0
    %59 = vmatprep.subr.mxu0 0.0
    %60 = vmatpush1.msra.mxu0 0.0
    %61 = vmatprep.subr.mxu0 0.0
    %62 = vmatpush1.msra.mxu0 0.0
    %63 = vmatprep.subr.mxu0 0.0
    %64 = vmatpush1.msra.mxu0 0.0
    %65 = vmatprep.subr.mxu0 0.0
    %66 = vmatpush1.msra.mxu0 0.0
    %67 = vmatprep.subr.mxu0 0.0
    %68 = vmatpush1.msra.mxu0 0.0
    %69 = vmatprep.subr.mxu0 0.0
    %70 = vmatpush1.msra.mxu0 0.0
    %71 = vmatprep.subr.mxu0 0.0
    %72 = vmatpush1.msra.mxu0 0.0
    %73 = vmatprep.subr.mxu0 0.0
    %74 = vmatpush1.msra.mxu0 0.0
    %75 = vmatprep.subr.mxu0 0.0
    %76 = vmatpush1.msra.mxu0 0.0
    %77 = vmatprep.subr.mxu0 0.0
    %78 = vmatpush1.msra.mxu0 0.0
    %79 = vmatprep.subr.mxu0 0.0
    %80 = vmatpush1.msra.mxu0 0.0
    %81 = vmatprep.subr.mxu0 0.0
    %82 = vmatpush1.msra.mxu0 0.0
    %83 = vmatprep.subr.mxu0 0.0
    %84 = vmatpush1.msra.mxu0 %v43
    %85 = vmatprep.subr.mxu0 0.0
    %86 = vmatpush1.msra.mxu0 %v42
    %87 = vmatprep.subr.mxu0 0.0
    %88 = vmatpush2.msra.mxu0 0.0
    %89 = vmatprep.subr.mxu0 0.0
    %90 = vmatpush2.msra.mxu0 0.0
    %91 = vmatprep.subr.mxu0 0.0
    %92 = vmatpush2.msra.mxu0 0.0
    %93 = vmatprep.subr.mxu0 0.0
    %94 = vmatpush2.msra.mxu0 0.0
    %95 = vmatprep.subr.mxu0 0.0
    %96 = vmatpush2.msra.mxu0 0.0
    %97 = vmatprep.subr.mxu0 0.0
    %98 = vmatpush2.msra.mxu0 0.0
    %99 = vmatprep.subr.mxu0 0.0
    %100 = vmatpush2.msra.mxu0 0.0
    %101 = vmatprep.subr.mxu0 0.0
    %102 = vmatpush2.msra.mxu0 0.0
    %103 = vmatprep.subr.mxu0 0.0
    %104 = vmatpush2.msra.mxu0 0.0
    %105 = vmatprep.subr.mxu0 0.0
    %106 = vmatpush2.msra.mxu0 0.0
    %107 = vmatprep.subr.mxu0 0.0
    %108 = vmatpush2.msra.mxu0 0.0
    %109 = vmatprep.subr.mxu0 0.0
    %110 = vmatpush2.msra.mxu0 0.0
    %111 = vmatprep.subr.mxu0 0.0
    %112 = vmatpush2.msra.mxu0 0.0
    %113 = vmatprep.subr.mxu0 0.0
    %114 = vmatpush2.msra.mxu0 0.0
    %115 = vmatprep.subr.mxu0 0.0
    %116 = vmatpush2.msra.mxu0 0.0
    %117 = vmatprep.subr.mxu0 0.0
    %118 = vmatpush2.msra.mxu0 0.0
    %119 = vmatprep.mubr.f32.mxu0 0.0
    %120 = vmatmul.mubr.f32.gmra.mxu0 %v53
    %v121 = vpop.f32.mrf.mxu0
    %v122 = vadd.f32 %v49, %v121
    %v123 = vpop.f32.mrf.mxu0
    %124 = vdwg.mxu0
    %v125 = vxor.u32 %v122, 2147483648
    %v126 = vmul.f32 %v125, 1.442695
    %v127 = vpow.pop %v126
    %v128 = vadd.f32 %v127, 1.0
    %v129 = vrcp.pop %v128
    %v130 = vmul.f32 1.0, %v129
    %v131 = vmul.f32 %v122, %v130
    %132 = vst [vmem:[#allocation7] sm:$0xff] %v131
    // Predicated region
    $region22: #{tpu_custom_call.1} parent=1 // pred_check
      _
    $region23: #{tpu_custom_call.1} parent=1 // pred_check_branch
      %134 = sbr.rel (0) target = $region25
    $region24: #{tpu_custom_call.1} parent=1 // pred_region
      %s136 = ssub.s32 128, 128
      %137 = vsyncadd [#allocation4], %s136
      %s139 = sshll.u32 [#allocation7], 4
      %s140 = int_to_ptr.vmem [resolvable:$true] %s139
      %142 = dma.vmem_to_hbm [thread:$0]  %s140, 128, %s3, [#allocation4]
    $region25: #{tpu_custom_call.1} parent=1 // pred_fallthru
      _
    // Predicated region
    $region26: #{tpu_custom_call.1} parent=1 // pred_check
      _
    $region27: #{tpu_custom_call.1} parent=1 // pred_check_branch
      %144 = sbr.rel (0) target = $region29
    $region28: #{tpu_custom_call.1} parent=1 // pred_region
      %145 = dma.done [#allocation4], 128
    $region29: #{tpu_custom_call.1} parent=1 // pred_fallthru
      _
    %146 = vsyncpa [#allocation3], 1
    %147 = vsyncpa [#allocation6], 1
    %148 = vsyncpa [#allocation4], 1

</llo_original>
